<compile_context>
chip_gen: v7x
topology: tpu7x:2x2x1
jax: 0.10.0
libtpu: 0.0.40
codegen_flags: <defaults>
</compile_context>

<pallas_src>
import jax
import jax.numpy as jnp
from jax import lax
from jax.experimental import pallas as pl
from jax.experimental.pallas import tpu as pltpu


def _round_up(x: int, m: int) -> int:
    return ((x + m - 1) // m) * m


def _vmem_capacity_bytes() -> int:
    """Per-TensorCore VMEM capacity; conservative v7x fallback if unqueryable."""
    try:
        cap = getattr(pltpu.get_tpu_info(), "vmem_capacity_bytes", None)
        if cap:
            return int(cap)
    except Exception:
        pass
    return 64 << 20  # v7x per-TC VMEM (smallest of v5e/v6e/v7x)


def _choose_block_queries(Q: int, K: int, D: int) -> int:
    """Largest TQ whose double-buffered, (8,128)-padded f32 tiles fit the budget."""
    cap = _vmem_capacity_bytes()
    # 2 inputs x 2 pipeline buffers of the padded tile <= cap / 2:
    #   v7x (64 MiB): 8 MiB per input tile  -> ~32 MiB pipeline residency
    #   v5e/v6e (128 MiB): 16 MiB per input -> ~64 MiB pipeline residency
    per_input_tile_budget = cap // 8
    row_bytes = _round_up(K * D, 128) * 4      # f32 element size: kernel upcasts
    tq = per_input_tile_budget // row_bytes
    tq = max(8, (tq // 8) * 8)                 # sublane-aligned
    return min(tq, max(8, _round_up(Q, 8)))


def _make_kernel(K: int, D: int, Q: int, tq: int):
    def kernel(t_ref, p_ref, out_ref):
        # t_ref / p_ref: (tq, K*D) lane-dense tiles; out_ref: (tq, 1) scores.
        t_sum = jnp.zeros((tq, D), jnp.float32)
        p_sum = jnp.zeros((tq, D), jnp.float32)

        # Static unrolled loop over the K items.  Static lane slices of the ref
        # are zero-cost views; loading per chunk keeps the upcast f32 working
        # set small even for bf16 inputs.  All work is row-independent.
        for i in range(K):
            tc = t_ref[:, i * D:(i + 1) * D].astype(jnp.float32)   # (tq, D)
            pc = p_ref[:, i * D:(i + 1) * D].astype(jnp.float32)   # (tq, D)
            t_sum = t_sum + tc * lax.rsqrt(
                jnp.sum(tc * tc, axis=-1, keepdims=True) + 1e-12)
            p_sum = p_sum + pc * lax.rsqrt(
                jnp.sum(pc * pc, axis=-1, keepdims=True) + 1e-12)

        # mean_{i,j} <t_i, p_j> == <sum_i t_i, sum_j p_j> / K^2  (exact).
        score = jnp.sum(t_sum * p_sum, axis=-1, keepdims=True) * (
            1.0 / jnp.float32(K * K))                               # (tq, 1)

        # The last block may extend past Q (inputs are NOT padded): those rows
        # contain unspecified data, so force their scores to exactly 0 before
        # storing.  Valid rows are untouched (the math is row-independent).
        row = lax.broadcasted_iota(jnp.int32, (tq, 1), 0)
        valid = (pl.program_id(0) * tq + row) < Q
        out_ref[...] = jnp.where(valid, score, 0.0)

    return kernel


def average_precision_at_k(pred_queries: jax.Array,
                           true_queries: jax.Array,
                           *,
                           block_queries: int | None = None) -> jax.Array:
    """pred_queries, true_queries: [Q, K, D] float arrays. Returns scalar f32.

    Best called under jax.jit so the (Q,K,D)->(Q,K*D) reshape folds to a bitcast.
    """
    Q, K, D = pred_queries.shape
    assert true_queries.shape == (Q, K, D)
    KD = K * D

    # Free, contiguous reshape -> lane-dense (Q, K*D) layout (no HBM copy).
    pred2 = pred_queries.reshape(Q, KD)
    true2 = true_queries.reshape(Q, KD)

    if block_queries is None:
        tq = _choose_block_queries(Q, K, D)
    else:
        tq = max(8, (block_queries // 8) * 8)

    num_blocks = (Q + tq - 1) // tq

    # VMEM accounting with padded-tile bytes (f32, because the kernel upcasts).
    cap = _vmem_capacity_bytes()
    tile_bytes = _round_up(tq, 8) * _round_up(KD, 128) * 4
    residency = 2 * 2 * tile_bytes                  # 2 inputs x double buffer
    vmem_limit = int(min(cap - (4 << 20), max(residency + (12 << 20), 32 << 20)))

    scores = pl.pallas_call(
        _make_kernel(K, D, Q, tq),
        out_shape=jax.ShapeDtypeStruct((num_blocks * tq, 1), jnp.float32),
        grid_spec=pl.GridSpec(
            grid=(num_blocks,),
            in_specs=[
                pl.BlockSpec((tq, KD), lambda b: (b, 0)),   # true_queries block
                pl.BlockSpec((tq, KD), lambda b: (b, 0)),   # pred_queries block
            ],
            out_specs=pl.BlockSpec((tq, 1), lambda b: (b, 0)),  # per-query scores
        ),
        compiler_params=pltpu.CompilerParams(
            dimension_semantics=("parallel",),      # disjoint output blocks
            vmem_limit_bytes=vmem_limit,
        ),
    )(true2, pred2)

    # Rows past Q are exactly 0, so summing everything then dividing by Q is exact.
    return jnp.sum(scores) / jnp.float32(Q)


def _reference(pred_queries, true_queries):
    t = jnp.asarray(true_queries, jnp.float32)
    p = jnp.asarray(pred_queries, jnp.float32)
    t_n = t * lax.rsqrt(jnp.sum(t * t, axis=-1, keepdims=True) + 1e-12)
    p_n = p * lax.rsqrt(jnp.sum(p * p, axis=-1, keepdims=True) + 1e-12)
    sim = jnp.einsum("qkd,qjd->qkj", t_n, p_n)      # [Q, K, K] pairwise cosines
    scores = jnp.mean(sim, axis=(1, 2))             # per-query scalar
    return jnp.sum(scores) / p.shape[0]


if __name__ == "__main__":
    # Q=50 queries, K=8 items per query, D=32 embedding dim.
    Q, K, D = 50, 8, 32
    key = jax.random.PRNGKey(0)
    k_pred, k_true = jax.random.split(key)
    pred_queries = jax.random.normal(k_pred, (Q, K, D), dtype=jnp.float32)
    true_queries = jax.random.normal(k_true, (Q, K, D), dtype=jnp.float32)

    ref = _reference(pred_queries, true_queries)

    # Ragged multi-block path: 4 blocks of 16 queries, last block only partially
    # valid (rows 48..49) -> exercises the no-pad tail mask.
    out_blocked = jax.block_until_ready(
        average_precision_at_k(pred_queries, true_queries, block_queries=16))
    # Auto (VMEM-budgeted) path: a single block covering all queries.
    out_auto = jax.block_until_ready(
        average_precision_at_k(pred_queries, true_queries))

    assert jnp.allclose(out_blocked, ref, atol=1e-5, rtol=1e-5), (out_blocked, ref)
    assert jnp.allclose(out_auto, ref, atol=1e-5, rtol=1e-5), (out_auto, ref)

    print("KERNEL_OK")
</pallas_src>

<mosaic_0001>
module attributes {stable_mosaic.version = 11 : i64} {
  func.func @kernel(%arg0: i32, %arg1: memref<16x256xf32, #tpu.memory_space<vmem>>, %arg2: memref<16x256xf32, #tpu.memory_space<vmem>>, %arg3: memref<16x1xf32, #tpu.memory_space<vmem>>) attributes {dimension_semantics = [#tpu.dimension_semantics<parallel>], iteration_bounds = array<i64: 4>, scalar_prefetch = 0 : i64, scratch_operands = 0 : i64, tpu.core_type = #tpu.core_type<tc>, window_params = [{transform_indices = @transform_0, window_bounds = array<i64: 16, 256>}, {transform_indices = @transform_1, window_bounds = array<i64: 16, 256>}, {transform_indices = @transform_2, window_bounds = array<i64: 16, 1>}]} {
    %cst = arith.constant 0.000000e+00 : f32
    %0 = vector.broadcast %cst : f32 to vector<16x32xf32>
    %cst_0 = arith.constant 0.000000e+00 : f32
    %1 = vector.broadcast %cst_0 : f32 to vector<16x32xf32>
    %c0 = arith.constant 0 : index
    %c0_1 = arith.constant 0 : index
    %2 = vector.load %arg1[%c0, %c0_1] : memref<16x256xf32, #tpu.memory_space<vmem>>, vector<16x32xf32>
    %c0_2 = arith.constant 0 : index
    %c0_3 = arith.constant 0 : index
    %3 = vector.load %arg2[%c0_2, %c0_3] : memref<16x256xf32, #tpu.memory_space<vmem>>, vector<16x32xf32>
    %4 = arith.mulf %2, %2 : vector<16x32xf32>
    %cst_4 = arith.constant dense<0.000000e+00> : vector<16xf32>
    %5 = vector.multi_reduction <add>, %4, %cst_4 [1] : vector<16x32xf32> to vector<16xf32>
    %6 = vector.shape_cast %5 : vector<16xf32> to vector<16x1xf32>
    %cst_5 = arith.constant 9.99999996E-13 : f32
    %7 = vector.broadcast %cst_5 : f32 to vector<16x1xf32>
    %8 = arith.addf %6, %7 : vector<16x1xf32>
    %9 = math.rsqrt %8 : vector<16x1xf32>
    %10 = vector.broadcast %9 : vector<16x1xf32> to vector<16x32xf32>
    %11 = arith.mulf %2, %10 : vector<16x32xf32>
    %12 = arith.addf %0, %11 : vector<16x32xf32>
    %13 = arith.mulf %3, %3 : vector<16x32xf32>
    %cst_6 = arith.constant dense<0.000000e+00> : vector<16xf32>
    %14 = vector.multi_reduction <add>, %13, %cst_6 [1] : vector<16x32xf32> to vector<16xf32>
    %15 = vector.shape_cast %14 : vector<16xf32> to vector<16x1xf32>
    %cst_7 = arith.constant 9.99999996E-13 : f32
    %16 = vector.broadcast %cst_7 : f32 to vector<16x1xf32>
    %17 = arith.addf %15, %16 : vector<16x1xf32>
    %18 = math.rsqrt %17 : vector<16x1xf32>
    %19 = vector.broadcast %18 : vector<16x1xf32> to vector<16x32xf32>
    %20 = arith.mulf %3, %19 : vector<16x32xf32>
    %21 = arith.addf %1, %20 : vector<16x32xf32>
    %c0_8 = arith.constant 0 : index
    %c32 = arith.constant 32 : index
    %22 = vector.load %arg1[%c0_8, %c32] : memref<16x256xf32, #tpu.memory_space<vmem>>, vector<16x32xf32>
    %c0_9 = arith.constant 0 : index
    %c32_10 = arith.constant 32 : index
    %23 = vector.load %arg2[%c0_9, %c32_10] : memref<16x256xf32, #tpu.memory_space<vmem>>, vector<16x32xf32>
    %24 = arith.mulf %22, %22 : vector<16x32xf32>
    %cst_11 = arith.constant dense<0.000000e+00> : vector<16xf32>
    %25 = vector.multi_reduction <add>, %24, %cst_11 [1] : vector<16x32xf32> to vector<16xf32>
    %26 = vector.shape_cast %25 : vector<16xf32> to vector<16x1xf32>
    %cst_12 = arith.constant 9.99999996E-13 : f32
    %27 = vector.broadcast %cst_12 : f32 to vector<16x1xf32>
    %28 = arith.addf %26, %27 : vector<16x1xf32>
    %29 = math.rsqrt %28 : vector<16x1xf32>
    %30 = vector.broadcast %29 : vector<16x1xf32> to vector<16x32xf32>
    %31 = arith.mulf %22, %30 : vector<16x32xf32>
    %32 = arith.addf %12, %31 : vector<16x32xf32>
    %33 = arith.mulf %23, %23 : vector<16x32xf32>
    %cst_13 = arith.constant dense<0.000000e+00> : vector<16xf32>
    %34 = vector.multi_reduction <add>, %33, %cst_13 [1] : vector<16x32xf32> to vector<16xf32>
    %35 = vector.shape_cast %34 : vector<16xf32> to vector<16x1xf32>
    %cst_14 = arith.constant 9.99999996E-13 : f32
    %36 = vector.broadcast %cst_14 : f32 to vector<16x1xf32>
    %37 = arith.addf %35, %36 : vector<16x1xf32>
    %38 = math.rsqrt %37 : vector<16x1xf32>
    %39 = vector.broadcast %38 : vector<16x1xf32> to vector<16x32xf32>
    %40 = arith.mulf %23, %39 : vector<16x32xf32>
    %41 = arith.addf %21, %40 : vector<16x32xf32>
    %c0_15 = arith.constant 0 : index
    %c64 = arith.constant 64 : index
    %42 = vector.load %arg1[%c0_15, %c64] : memref<16x256xf32, #tpu.memory_space<vmem>>, vector<16x32xf32>
    %c0_16 = arith.constant 0 : index
    %c64_17 = arith.constant 64 : index
    %43 = vector.load %arg2[%c0_16, %c64_17] : memref<16x256xf32, #tpu.memory_space<vmem>>, vector<16x32xf32>
    %44 = arith.mulf %42, %42 : vector<16x32xf32>
    %cst_18 = arith.constant dense<0.000000e+00> : vector<16xf32>
    %45 = vector.multi_reduction <add>, %44, %cst_18 [1] : vector<16x32xf32> to vector<16xf32>
    %46 = vector.shape_cast %45 : vector<16xf32> to vector<16x1xf32>
    %cst_19 = arith.constant 9.99999996E-13 : f32
    %47 = vector.broadcast %cst_19 : f32 to vector<16x1xf32>
    %48 = arith.addf %46, %47 : vector<16x1xf32>
    %49 = math.rsqrt %48 : vector<16x1xf32>
    %50 = vector.broadcast %49 : vector<16x1xf32> to vector<16x32xf32>
    %51 = arith.mulf %42, %50 : vector<16x32xf32>
    %52 = arith.addf %32, %51 : vector<16x32xf32>
    %53 = arith.mulf %43, %43 : vector<16x32xf32>
    %cst_20 = arith.constant dense<0.000000e+00> : vector<16xf32>
    %54 = vector.multi_reduction <add>, %53, %cst_20 [1] : vector<16x32xf32> to vector<16xf32>
    %55 = vector.shape_cast %54 : vector<16xf32> to vector<16x1xf32>
    %cst_21 = arith.constant 9.99999996E-13 : f32
    %56 = vector.broadcast %cst_21 : f32 to vector<16x1xf32>
    %57 = arith.addf %55, %56 : vector<16x1xf32>
    %58 = math.rsqrt %57 : vector<16x1xf32>
    %59 = vector.broadcast %58 : vector<16x1xf32> to vector<16x32xf32>
    %60 = arith.mulf %43, %59 : vector<16x32xf32>
    %61 = arith.addf %41, %60 : vector<16x32xf32>
    %c0_22 = arith.constant 0 : index
    %c96 = arith.constant 96 : index
    %62 = vector.load %arg1[%c0_22, %c96] : memref<16x256xf32, #tpu.memory_space<vmem>>, vector<16x32xf32>
    %c0_23 = arith.constant 0 : index
    %c96_24 = arith.constant 96 : index
    %63 = vector.load %arg2[%c0_23, %c96_24] : memref<16x256xf32, #tpu.memory_space<vmem>>, vector<16x32xf32>
    %64 = arith.mulf %62, %62 : vector<16x32xf32>
    %cst_25 = arith.constant dense<0.000000e+00> : vector<16xf32>
    %65 = vector.multi_reduction <add>, %64, %cst_25 [1] : vector<16x32xf32> to vector<16xf32>
    %66 = vector.shape_cast %65 : vector<16xf32> to vector<16x1xf32>
    %cst_26 = arith.constant 9.99999996E-13 : f32
    %67 = vector.broadcast %cst_26 : f32 to vector<16x1xf32>
    %68 = arith.addf %66, %67 : vector<16x1xf32>
    %69 = math.rsqrt %68 : vector<16x1xf32>
    %70 = vector.broadcast %69 : vector<16x1xf32> to vector<16x32xf32>
    %71 = arith.mulf %62, %70 : vector<16x32xf32>
    %72 = arith.addf %52, %71 : vector<16x32xf32>
    %73 = arith.mulf %63, %63 : vector<16x32xf32>
    %cst_27 = arith.constant dense<0.000000e+00> : vector<16xf32>
    %74 = vector.multi_reduction <add>, %73, %cst_27 [1] : vector<16x32xf32> to vector<16xf32>
    %75 = vector.shape_cast %74 : vector<16xf32> to vector<16x1xf32>
    %cst_28 = arith.constant 9.99999996E-13 : f32
    %76 = vector.broadcast %cst_28 : f32 to vector<16x1xf32>
    %77 = arith.addf %75, %76 : vector<16x1xf32>
    %78 = math.rsqrt %77 : vector<16x1xf32>
    %79 = vector.broadcast %78 : vector<16x1xf32> to vector<16x32xf32>
    %80 = arith.mulf %63, %79 : vector<16x32xf32>
    %81 = arith.addf %61, %80 : vector<16x32xf32>
    %c0_29 = arith.constant 0 : index
    %c128 = arith.constant 128 : index
    %82 = vector.load %arg1[%c0_29, %c128] : memref<16x256xf32, #tpu.memory_space<vmem>>, vector<16x32xf32>
    %c0_30 = arith.constant 0 : index
    %c128_31 = arith.constant 128 : index
    %83 = vector.load %arg2[%c0_30, %c128_31] : memref<16x256xf32, #tpu.memory_space<vmem>>, vector<16x32xf32>
    %84 = arith.mulf %82, %82 : vector<16x32xf32>
    %cst_32 = arith.constant dense<0.000000e+00> : vector<16xf32>
    %85 = vector.multi_reduction <add>, %84, %cst_32 [1] : vector<16x32xf32> to vector<16xf32>
    %86 = vector.shape_cast %85 : vector<16xf32> to vector<16x1xf32>
    %cst_33 = arith.constant 9.99999996E-13 : f32
    %87 = vector.broadcast %cst_33 : f32 to vector<16x1xf32>
    %88 = arith.addf %86, %87 : vector<16x1xf32>
    %89 = math.rsqrt %88 : vector<16x1xf32>
    %90 = vector.broadcast %89 : vector<16x1xf32> to vector<16x32xf32>
    %91 = arith.mulf %82, %90 : vector<16x32xf32>
    %92 = arith.addf %72, %91 : vector<16x32xf32>
    %93 = arith.mulf %83, %83 : vector<16x32xf32>
    %cst_34 = arith.constant dense<0.000000e+00> : vector<16xf32>
    %94 = vector.multi_reduction <add>, %93, %cst_34 [1] : vector<16x32xf32> to vector<16xf32>
    %95 = vector.shape_cast %94 : vector<16xf32> to vector<16x1xf32>
    %cst_35 = arith.constant 9.99999996E-13 : f32
    %96 = vector.broadcast %cst_35 : f32 to vector<16x1xf32>
    %97 = arith.addf %95, %96 : vector<16x1xf32>
    %98 = math.rsqrt %97 : vector<16x1xf32>
    %99 = vector.broadcast %98 : vector<16x1xf32> to vector<16x32xf32>
    %100 = arith.mulf %83, %99 : vector<16x32xf32>
    %101 = arith.addf %81, %100 : vector<16x32xf32>
    %c0_36 = arith.constant 0 : index
    %c160 = arith.constant 160 : index
    %102 = vector.load %arg1[%c0_36, %c160] : memref<16x256xf32, #tpu.memory_space<vmem>>, vector<16x32xf32>
    %c0_37 = arith.constant 0 : index
    %c160_38 = arith.constant 160 : index
    %103 = vector.load %arg2[%c0_37, %c160_38] : memref<16x256xf32, #tpu.memory_space<vmem>>, vector<16x32xf32>
    %104 = arith.mulf %102, %102 : vector<16x32xf32>
    %cst_39 = arith.constant dense<0.000000e+00> : vector<16xf32>
    %105 = vector.multi_reduction <add>, %104, %cst_39 [1] : vector<16x32xf32> to vector<16xf32>
    %106 = vector.shape_cast %105 : vector<16xf32> to vector<16x1xf32>
    %cst_40 = arith.constant 9.99999996E-13 : f32
    %107 = vector.broadcast %cst_40 : f32 to vector<16x1xf32>
    %108 = arith.addf %106, %107 : vector<16x1xf32>
    %109 = math.rsqrt %108 : vector<16x1xf32>
    %110 = vector.broadcast %109 : vector<16x1xf32> to vector<16x32xf32>
    %111 = arith.mulf %102, %110 : vector<16x32xf32>
    %112 = arith.addf %92, %111 : vector<16x32xf32>
    %113 = arith.mulf %103, %103 : vector<16x32xf32>
    %cst_41 = arith.constant dense<0.000000e+00> : vector<16xf32>
    %114 = vector.multi_reduction <add>, %113, %cst_41 [1] : vector<16x32xf32> to vector<16xf32>
    %115 = vector.shape_cast %114 : vector<16xf32> to vector<16x1xf32>
    %cst_42 = arith.constant 9.99999996E-13 : f32
    %116 = vector.broadcast %cst_42 : f32 to vector<16x1xf32>
    %117 = arith.addf %115, %116 : vector<16x1xf32>
    %118 = math.rsqrt %117 : vector<16x1xf32>
    %119 = vector.broadcast %118 : vector<16x1xf32> to vector<16x32xf32>
    %120 = arith.mulf %103, %119 : vector<16x32xf32>
    %121 = arith.addf %101, %120 : vector<16x32xf32>
    %c0_43 = arith.constant 0 : index
    %c192 = arith.constant 192 : index
    %122 = vector.load %arg1[%c0_43, %c192] : memref<16x256xf32, #tpu.memory_space<vmem>>, vector<16x32xf32>
    %c0_44 = arith.constant 0 : index
    %c192_45 = arith.constant 192 : index
    %123 = vector.load %arg2[%c0_44, %c192_45] : memref<16x256xf32, #tpu.memory_space<vmem>>, vector<16x32xf32>
    %124 = arith.mulf %122, %122 : vector<16x32xf32>
    %cst_46 = arith.constant dense<0.000000e+00> : vector<16xf32>
    %125 = vector.multi_reduction <add>, %124, %cst_46 [1] : vector<16x32xf32> to vector<16xf32>
    %126 = vector.shape_cast %125 : vector<16xf32> to vector<16x1xf32>
    %cst_47 = arith.constant 9.99999996E-13 : f32
    %127 = vector.broadcast %cst_47 : f32 to vector<16x1xf32>
    %128 = arith.addf %126, %127 : vector<16x1xf32>
    %129 = math.rsqrt %128 : vector<16x1xf32>
    %130 = vector.broadcast %129 : vector<16x1xf32> to vector<16x32xf32>
    %131 = arith.mulf %122, %130 : vector<16x32xf32>
    %132 = arith.addf %112, %131 : vector<16x32xf32>
    %133 = arith.mulf %123, %123 : vector<16x32xf32>
    %cst_48 = arith.constant dense<0.000000e+00> : vector<16xf32>
    %134 = vector.multi_reduction <add>, %133, %cst_48 [1] : vector<16x32xf32> to vector<16xf32>
    %135 = vector.shape_cast %134 : vector<16xf32> to vector<16x1xf32>
    %cst_49 = arith.constant 9.99999996E-13 : f32
    %136 = vector.broadcast %cst_49 : f32 to vector<16x1xf32>
    %137 = arith.addf %135, %136 : vector<16x1xf32>
    %138 = math.rsqrt %137 : vector<16x1xf32>
    %139 = vector.broadcast %138 : vector<16x1xf32> to vector<16x32xf32>
    %140 = arith.mulf %123, %139 : vector<16x32xf32>
    %141 = arith.addf %121, %140 : vector<16x32xf32>
    %c0_50 = arith.constant 0 : index
    %c224 = arith.constant 224 : index
    %142 = vector.load %arg1[%c0_50, %c224] : memref<16x256xf32, #tpu.memory_space<vmem>>, vector<16x32xf32>
    %c0_51 = arith.constant 0 : index
    %c224_52 = arith.constant 224 : index
    %143 = vector.load %arg2[%c0_51, %c224_52] : memref<16x256xf32, #tpu.memory_space<vmem>>, vector<16x32xf32>
    %144 = arith.mulf %142, %142 : vector<16x32xf32>
    %cst_53 = arith.constant dense<0.000000e+00> : vector<16xf32>
    %145 = vector.multi_reduction <add>, %144, %cst_53 [1] : vector<16x32xf32> to vector<16xf32>
    %146 = vector.shape_cast %145 : vector<16xf32> to vector<16x1xf32>
    %cst_54 = arith.constant 9.99999996E-13 : f32
    %147 = vector.broadcast %cst_54 : f32 to vector<16x1xf32>
    %148 = arith.addf %146, %147 : vector<16x1xf32>
    %149 = math.rsqrt %148 : vector<16x1xf32>
    %150 = vector.broadcast %149 : vector<16x1xf32> to vector<16x32xf32>
    %151 = arith.mulf %142, %150 : vector<16x32xf32>
    %152 = arith.addf %132, %151 : vector<16x32xf32>
    %153 = arith.mulf %143, %143 : vector<16x32xf32>
    %cst_55 = arith.constant dense<0.000000e+00> : vector<16xf32>
    %154 = vector.multi_reduction <add>, %153, %cst_55 [1] : vector<16x32xf32> to vector<16xf32>
    %155 = vector.shape_cast %154 : vector<16xf32> to vector<16x1xf32>
    %cst_56 = arith.constant 9.99999996E-13 : f32
    %156 = vector.broadcast %cst_56 : f32 to vector<16x1xf32>
    %157 = arith.addf %155, %156 : vector<16x1xf32>
    %158 = math.rsqrt %157 : vector<16x1xf32>
    %159 = vector.broadcast %158 : vector<16x1xf32> to vector<16x32xf32>
    %160 = arith.mulf %143, %159 : vector<16x32xf32>
    %161 = arith.addf %141, %160 : vector<16x32xf32>
    %162 = arith.mulf %152, %161 : vector<16x32xf32>
    %cst_57 = arith.constant dense<0.000000e+00> : vector<16xf32>
    %163 = vector.multi_reduction <add>, %162, %cst_57 [1] : vector<16x32xf32> to vector<16xf32>
    %164 = vector.shape_cast %163 : vector<16xf32> to vector<16x1xf32>
    %cst_58 = arith.constant 1.000000e+00 : f32
    %cst_59 = arith.constant 6.400000e+01 : f32
    %165 = arith.divf %cst_58, %cst_59 : f32
    %166 = vector.broadcast %165 : f32 to vector<16x1xf32>
    %167 = arith.mulf %164, %166 : vector<16x1xf32>
    %168 = tpu.iota {dimensions = array<i32: 0>} : vector<16x1xi32>
    %c16_i32 = arith.constant 16 : i32
    %169 = arith.muli %arg0, %c16_i32 : i32
    %170 = vector.broadcast %169 : i32 to vector<16x1xi32>
    %171 = arith.addi %170, %168 : vector<16x1xi32>
    %c50_i32 = arith.constant 50 : i32
    %172 = vector.broadcast %c50_i32 : i32 to vector<16x1xi32>
    %173 = arith.cmpi slt, %171, %172 : vector<16x1xi32>
    %cst_60 = arith.constant 0.000000e+00 : f32
    %174 = vector.broadcast %cst_60 : f32 to vector<16x1xf32>
    %175 = arith.select %173, %167, %174 : vector<16x1xi1>, vector<16x1xf32>
    %c0_61 = arith.constant 0 : index
    %c0_62 = arith.constant 0 : index
    %176 = vector.load %arg3[%c0_61, %c0_62] : memref<16x1xf32, #tpu.memory_space<vmem>>, vector<16x1xf32>
    tpu.vector_store %arg3[%c0_61, %c0_62], %175 {strides = array<i32>} : memref<16x1xf32, #tpu.memory_space<vmem>>, vector<16x1xf32>,
    return
  }
  func.func @transform_0(%arg0: i32) -> (i32, i32) {
    %c0_i32 = arith.constant 0 : i32
    %c0_i32_0 = arith.constant 0 : i32
    return %arg0, %c0_i32 : i32, i32
  }
  func.func @transform_1(%arg0: i32) -> (i32, i32) {
    %c0_i32 = arith.constant 0 : i32
    %c0_i32_0 = arith.constant 0 : i32
    return %arg0, %c0_i32 : i32, i32
  }
  func.func @transform_2(%arg0: i32) -> (i32, i32) {
    %c0_i32 = arith.constant 0 : i32
    %c0_i32_0 = arith.constant 0 : i32
    return %arg0, %c0_i32 : i32, i32
  }
}

</mosaic_0001>

<llo_original>
// kernel: tpu_custom_call.1
$region0: #{tpu_custom_call.1}
  #allocation0 [shape = 'u32[]', space=smem, size = 0x4, offset = 0x4, fixed_abs, tag = 'smem constant byte address 0x4 - core index']
  #allocation1 [shape = 'u32[144,128]{1,0:T(1,128)}', space=vmem, size = 0x12000, scoped, tag = 'internal scratch']
  %s0 = inlined_call_operand.hbm [shape: f32[50,256], index: 0, kind: input, shape index: {}]
  %s1 = inlined_call_operand.hbm [shape: f32[50,256], index: 1, kind: input, shape index: {}]
  %s2 = inlined_call_operand.vmem [shape: f32[64,1], index: 2, kind: output, shape index: {}]
  %s3 = sld [smem:[#allocation0]]
  $region49: #{tpu_custom_call.1} parent=0
    _
  %s5 = ssub.s32 1, %s3
  %s6 = scalar_select 0, %s5, %s3
  $region1: #{tpu_custom_call.1} parent=0
    #allocation2 [shape = 'u8[32768]{0}', space=vmem, size = 0x8000, scoped, tag = 'input window, operand 0']
    #allocation3 [shape = 's32[2]{0}', space=sflag, size = 0x8, scoped, tag = 'scoped memory for tpu_custom_call.1']
    #allocation4 [shape = 'u8[32768]{0}', space=vmem, size = 0x8000, scoped, tag = 'input window, operand 1']
    #allocation5 [shape = 's32[2]{0}', space=sflag, size = 0x8, scoped, tag = 'scoped memory for tpu_custom_call.1']
    %7 = vsyncpa [#allocation3], 0
    %s8 = scalar_lea.sflag [#allocation3], 1
    %9 = vsyncpa %s8, 0
    %10 = vsyncpa [#allocation5], 0
    %s11 = scalar_lea.sflag [#allocation5], 1
    %12 = vsyncpa %s11, 0
    loop: start=0, step=1, limit=6
    $region2: #{tpu_custom_call.1} parent=1 // loop_pre_header
      _
    $region3: #{tpu_custom_call.1} parent=1 // loop_header
      %s14 = sphi 0, %s18
      %p15 = scmp.ge.s32.totalorder %s14, 6
      %s24 = sphi 0, %s26
      %s27 = sphi 0, %s24
      %s28 = sphi 0, %s27
      %s44 = sphi 0, %s28
      %s50 = sphi 0, %s52
      %s53 = sphi 0, %s50
      %s54 = sphi 0, %s53
      %s70 = sphi 0, %s54
      %s76 = sphi 0, %s78
      %s79 = sphi 0, %s76
      %s80 = sphi 0, %s79
      %s96 = sphi 0, %s80
    $region4: #{tpu_custom_call.1} parent=1 // loop_header_branch
      %17 = sbr.rel (%p15) target = $region8
    $region5: #{tpu_custom_call.1} parent=1 // loop_body
      %s19 = ssub.s32 %s14, 1
      %s20 = ssub.s32 %s14, 2
      %s21 = sadd.s32 %s14, 1
      %s22 = ssub.s32 %s14, %s21
      %p23 = scmp.eq.s32.totalorder %s22, 0
      %s25 = sadd.s32 %s24, 1
      %s26 = scalar_select %p23, %s24, %s25
      %p29 = pneg %p23
      %p30 = scmp.eq.s32.totalorder %s14, 3
      %p31 = por %p29, %p30
      %p32 = scmp.ne.s32.totalorder %s24, %s27
      %p33 = scmp.eq.s32.totalorder %s14, 0
      %p34 = por %p32, %p33
      %p35 = scmp.ne.s32.totalorder %s24, %s27
      %p36 = scmp.eq.s32.totalorder %s19, 3
      %p37 = por %p35, %p36
      %p38 = scmp.ne.s32.totalorder %s27, %s28
      %p39 = scmp.eq.s32.totalorder %s19, 0
      %p40 = por %p38, %p39
      %p41 = scmp.ne.s32.totalorder %s27, %s28
      %p42 = scmp.eq.s32.totalorder %s20, 3
      %p43 = por %p41, %p42
      %p45 = scmp.ne.s32.totalorder %s28, %s44
      %p46 = scmp.eq.s32.totalorder %s20, 0
      %p47 = por %p45, %p46
      %s48 = ssub.s32 %s14, %s21
      %p49 = scmp.eq.s32.totalorder %s48, 0
      %s51 = sadd.s32 %s50, 1
      %s52 = scalar_select %p49, %s50, %s51
      %p55 = pneg %p49
      %p56 = scmp.eq.s32.totalorder %s14, 3
      %p57 = por %p55, %p56
      %p58 = scmp.ne.s32.totalorder %s50, %s53
      %p59 = scmp.eq.s32.totalorder %s14, 0
      %p60 = por %p58, %p59
      %p61 = scmp.ne.s32.totalorder %s50, %s53
      %p62 = scmp.eq.s32.totalorder %s19, 3
      %p63 = por %p61, %p62
      %p64 = scmp.ne.s32.totalorder %s53, %s54
      %p65 = scmp.eq.s32.totalorder %s19, 0
      %p66 = por %p64, %p65
      %p67 = scmp.ne.s32.totalorder %s53, %s54
      %p68 = scmp.eq.s32.totalorder %s20, 3
      %p69 = por %p67, %p68
      %p71 = scmp.ne.s32.totalorder %s54, %s70
      %p72 = scmp.eq.s32.totalorder %s20, 0
      %p73 = por %p71, %p72
      %s74 = ssub.s32 %s14, %s21
      %p75 = scmp.eq.s32.totalorder %s74, 0
      %s77 = sadd.s32 %s76, 1
      %s78 = scalar_select %p75, %s76, %s77
      %p81 = pneg %p75
      %p82 = scmp.eq.s32.totalorder %s14, 3
      %p83 = por %p81, %p82
      %p84 = scmp.ne.s32.totalorder %s76, %s79
      %p85 = scmp.eq.s32.totalorder %s14, 0
      %p86 = por %p84, %p85
      %p87 = scmp.ne.s32.totalorder %s76, %s79
      %p88 = scmp.eq.s32.totalorder %s19, 3
      %p89 = por %p87, %p88
      %p90 = scmp.ne.s32.totalorder %s79, %s80
      %p91 = scmp.eq.s32.totalorder %s19, 0
      %p92 = por %p90, %p91
      %p93 = scmp.ne.s32.totalorder %s79, %s80
      %p94 = scmp.eq.s32.totalorder %s20, 3
      %p95 = por %p93, %p94
      %p97 = scmp.ne.s32.totalorder %s80, %s96
      %p98 = scmp.eq.s32.totalorder %s20, 0
      %p99 = por %p97, %p98
      %p100 = scmp.le.s32.totalorder 1, %s14
      %p101 = scmp.lt.s32.totalorder %s14, 5
      %p102 = pnand %p100, %p101
      %p103 = pneg %p102
      // Predicated region
      $region9: #{tpu_custom_call.1} parent=5 // pred_check
        _
      $region10: #{tpu_custom_call.1} parent=5 // pred_check_branch
        %105 = sbr.rel (%p102) target = $region12
      $region11: #{tpu_custom_call.1} parent=5 // pred_region
        %s106 = ssub.s32 %s14, 1
      $region12: #{tpu_custom_call.1} parent=5 // pred_fallthru
        _
      %p107 = scmp.lt.s32.totalorder %s14, 4
      // Predicated region
      $region13: #{tpu_custom_call.1} parent=5 // pred_check
        %p108 = pneg %p107
      $region14: #{tpu_custom_call.1} parent=5 // pred_check_branch
        %110 = sbr.rel (%p108) target = $region16
      $region15: #{tpu_custom_call.1} parent=5 // pred_region
        // Predicated region
        $region17: #{tpu_custom_call.1} parent=15 // pred_check
          %p111 = pneg %p34
        $region18: #{tpu_custom_call.1} parent=15 // pred_check_branch
          %113 = sbr.rel (%p111) target = $region20
        $region19: #{tpu_custom_call.1} parent=15 // pred_region
          %s114 = sand.u32 %s24, 1
          %s115 = scalar_lea.sflag [#allocation3], %s114
          %s116 = sand.u32 %s24, 1
          %s117 = smul.addr %s116, 32
          %s118 = scalar_lea.vmem [#allocation2], %s117
          %s119 = smul.u32 2, %s14
          %s120 = ssub.s32 7, %s119
          %p121 = scmp.lt.s32.totalorder %s120, 2
          %s122 = scalar_select %p121, %s120, 2
          %s123 = smul.u32 128, %s122
          %s124 = smul.u32 %s123, 2
          %s126 = ssub.s32 512, %s124
          %127 = vsyncadd %s115, %s126
          %p128 = scmp.ne.s32.totalorder 0, %s124
          %s129 = smul.addr %s119, 2
          %s130 = smul.addr %s129, 128
          %s131 = scalar_lea.hbm %s0, %s130
          %s132 = smul.u32 16, %s122
          %s133 = sshll.u32 %s118, 4
          %s134 = int_to_ptr.vmem [resolvable:$true] %s133
          %s135 = sshll.u32 %s132, 4
          %139 = dma.hbm_to_vmem [thread:$0]  (%p128), %s131, %s135, %s134, %s115, 256, 256, 16
        $region20: #{tpu_custom_call.1} parent=15 // pred_fallthru
          _
        // Predicated region
        $region21: #{tpu_custom_call.1} parent=15 // pred_check
          %p140 = pneg %p60
        $region22: #{tpu_custom_call.1} parent=15 // pred_check_branch
          %142 = sbr.rel (%p140) target = $region24
        $region23: #{tpu_custom_call.1} parent=15 // pred_region
          %s143 = sand.u32 %s50, 1
          %s144 = scalar_lea.sflag [#allocation5], %s143
          %s145 = sand.u32 %s50, 1
          %s146 = smul.addr %s145, 32
          %s147 = scalar_lea.vmem [#allocation4], %s146
          %s148 = smul.u32 2, %s14
          %s149 = ssub.s32 7, %s148
          %p150 = scmp.lt.s32.totalorder %s149, 2
          %s151 = scalar_select %p150, %s149, 2
          %s152 = smul.u32 128, %s151
          %s153 = smul.u32 %s152, 2
          %s155 = ssub.s32 512, %s153
          %156 = vsyncadd %s144, %s155
          %p157 = scmp.ne.s32.totalorder 0, %s153
          %s158 = smul.addr %s148, 2
          %s159 = smul.addr %s158, 128
          %s160 = scalar_lea.hbm %s1, %s159
          %s161 = smul.u32 16, %s151
          %s162 = sshll.u32 %s147, 4
          %s163 = int_to_ptr.vmem [resolvable:$true] %s162
          %s164 = sshll.u32 %s161, 4
          %168 = dma.hbm_to_vmem [thread:$0]  (%p157), %s160, %s164, %s163, %s144, 256, 256, 16
        $region24: #{tpu_custom_call.1} parent=15 // pred_fallthru
          _
      $region16: #{tpu_custom_call.1} parent=5 // pred_fallthru
        _
      %p169 = scmp.le.s32.totalorder 1, %s14
      %p170 = scmp.lt.s32.totalorder %s14, 5
      %p171 = pnand %p169, %p170
      %p172 = pneg %p171
      // Predicated region
      $region25: #{tpu_custom_call.1} parent=5 // pred_check
        _
      $region26: #{tpu_custom_call.1} parent=5 // pred_check_branch
        %174 = sbr.rel (%p171) target = $region28
      $region27: #{tpu_custom_call.1} parent=5 // pred_region
        %s175 = ssub.s32 %s14, 1
        %s176 = sand.u32 %s27, 1
        %s177 = scalar_lea.sflag [#allocation3], %s176
        %s178 = sand.u32 %s27, 1
        %s179 = smul.addr %s178, 32
        %s180 = scalar_lea.vmem [#allocation2], %s179
        // Predicated region
        $region29: #{tpu_custom_call.1} parent=27 // pred_check
          %p181 = pneg %p40
        $region30: #{tpu_custom_call.1} parent=27 // pred_check_branch
          %183 = sbr.rel (%p181) target = $region32
        $region31: #{tpu_custom_call.1} parent=27 // pred_region
          %184 = dma.done %s177, 512
        $region32: #{tpu_custom_call.1} parent=27 // pred_fallthru
          _
        %s185 = sand.u32 %s53, 1
        %s186 = scalar_lea.sflag [#allocation5], %s185
        %s187 = sand.u32 %s53, 1
        %s188 = smul.addr %s187, 32
        %s189 = scalar_lea.vmem [#allocation4], %s188
        // Predicated region
        $region33: #{tpu_custom_call.1} parent=27 // pred_check
          %p190 = pneg %p66
        $region34: #{tpu_custom_call.1} parent=27 // pred_check_branch
          %192 = sbr.rel (%p190) target = $region36
        $region35: #{tpu_custom_call.1} parent=27 // pred_region
          %193 = dma.done %s186, 512
        $region36: #{tpu_custom_call.1} parent=27 // pred_fallthru
          _
        %s194 = sand.u32 %s27, 1
        %s195 = scalar_lea.sflag [#allocation3], %s194
        %s196 = sand.u32 %s27, 1
        %s197 = smul.addr %s196, 32
        %s198 = scalar_lea.vmem [#allocation2], %s197
        %p199 = pneg %p40
        %p200 = pneg %p37
        %s201 = sand.u32 %s53, 1
        %s202 = scalar_lea.sflag [#allocation5], %s201
        %s203 = sand.u32 %s53, 1
        %s204 = smul.addr %s203, 32
        %s205 = scalar_lea.vmem [#allocation4], %s204
        %p206 = pneg %p66
        %p207 = pneg %p63
        %p208 = pneg %p92
        %p209 = pneg %p89
        %s210 = smul.u32 2, %s19
        %p211 = scmp.lt.s32.totalorder %s210, 7
        %s212 = scalar_select %p211, %s210, 7
        %s213 = smul.addr %s212, 8
        %s214 = scalar_lea.vmem %s2, %s213
        %s215 = smul.u32 2, %s19
        %s216 = ssub.s32 7, %s215
        %p217 = scmp.lt.s32.totalorder %s216, 2
        %s218 = scalar_select %p217, %s216, 2
        %s219 = smul.u32 128, %s218
        %s220 = smul.u32 %s219, 2
        %s221 = smul.u32 2, %s19
        %s222 = ssub.s32 7, %s221
        %p223 = scmp.lt.s32.totalorder %s222, 2
        %s224 = scalar_select %p223, %s222, 2
        %s225 = smul.u32 128, %s224
        %s226 = smul.u32 %s225, 2
        %s227 = smul.u32 2, %s19
        %p228 = scmp.lt.s32.totalorder %s227, 7
        %s229 = scalar_select %p228, %s227, 7
        %s230 = smul.addr %s229, 8
        %s231 = scalar_lea.vmem %s2, %s230
        %s232 = smul.u32 2, %s19
        %v233 = vld [vmem:[%s180] sm:$0xff]
        %v234 = vld [vmem:[%s180 + $0x10] sm:$0xff]
        %v235 = vld [vmem:[%s189] sm:$0xff]
        %v236 = vld [vmem:[%s189 + $0x10] sm:$0xff]
        %v237 = vmul.f32 %v233, %v233
        %v238 = vmul.f32 %v234, %v234
        %vm239 = vcmask 261120
        %v240 = vsel %vm239, %v237, 0.0
        %241 = vadd.xlane.f32.xlu0 %v240
        %v242 = vpop.xlane.xlu0 %241
        %v243 = vsel %vm239, %v238, 0.0
        %244 = vadd.xlane.f32.xlu0 %v243
        %v245 = vpop.xlane.xlu0 %244
        %v246 = vadd.f32 %v242, 1e-12
        %v247 = vadd.f32 %v245, 1e-12
        %v248 = vrsqrt.pop %v246
        %v249 = vrsqrt.pop %v247
        %v250 = vmul.f32 %v233, %v248
        %v251 = vmul.f32 %v234, %v249
        %v252 = vadd.f32 %v250, 0.0
        %v253 = vadd.f32 %v251, 0.0
        %v254 = vmul.f32 %v235, %v235
        %v255 = vmul.f32 %v236, %v236
        %v256 = vsel %vm239, %v254, 0.0
        %257 = vadd.xlane.f32.xlu0 %v256
        %v258 = vpop.xlane.xlu0 %257
        %v259 = vsel %vm239, %v255, 0.0
        %260 = vadd.xlane.f32.xlu0 %v259
        %v261 = vpop.xlane.xlu0 %260
        %v262 = vadd.f32 %v258, 1e-12
        %v263 = vadd.f32 %v261, 1e-12
        %v264 = vrsqrt.pop %v262
        %v265 = vrsqrt.pop %v263
        %v266 = vmul.f32 %v235, %v264
        %v267 = vmul.f32 %v236, %v265
        %v268 = vadd.f32 %v266, 0.0
        %v269 = vadd.f32 %v267, 0.0
        %272 = vrot.lane.b32.xlu0 %v237, 96
        %v273 = vpop.permute.xlu0 %272
        %274 = vrot.lane.b32.xlu0 %v238, 96
        %v275 = vpop.permute.xlu0 %274
        %v278 = vsel %vm239, %v273, 0.0
        %279 = vadd.xlane.f32.xlu0 %v278
        %v280 = vpop.xlane.xlu0 %279
        %v281 = vsel %vm239, %v275, 0.0
        %282 = vadd.xlane.f32.xlu0 %v281
        %v283 = vpop.xlane.xlu0 %282
        %v284 = vadd.f32 %v280, 1e-12
        %v285 = vadd.f32 %v283, 1e-12
        %v286 = vrsqrt.pop %v284
        %v287 = vrsqrt.pop %v285
        %v288 = vmul.f32 %v233, %v286
        %v289 = vmul.f32 %v234, %v287
        %292 = vrot.lane.b32.xlu0 %v288, 96
        %v293 = vpop.permute.xlu0 %292
        %294 = vrot.lane.b32.xlu0 %v289, 96
        %v295 = vpop.permute.xlu0 %294
        %v298 = vadd.f32 %v252, %v293
        %v299 = vadd.f32 %v253, %v295
        %302 = vrot.lane.b32.xlu0 %v254, 96
        %v303 = vpop.permute.xlu0 %302
        %304 = vrot.lane.b32.xlu0 %v255, 96
        %v305 = vpop.permute.xlu0 %304
        %v308 = vsel %vm239, %v303, 0.0
        %309 = vadd.xlane.f32.xlu0 %v308
        %v310 = vpop.xlane.xlu0 %309
        %v311 = vsel %vm239, %v305, 0.0
        %312 = vadd.xlane.f32.xlu0 %v311
        %v313 = vpop.xlane.xlu0 %312
        %v314 = vadd.f32 %v310, 1e-12
        %v315 = vadd.f32 %v313, 1e-12
        %v316 = vrsqrt.pop %v314
        %v317 = vrsqrt.pop %v315
        %v318 = vmul.f32 %v235, %v316
        %v319 = vmul.f32 %v236, %v317
        %322 = vrot.lane.b32.xlu0 %v318, 96
        %v323 = vpop.permute.xlu0 %322
        %324 = vrot.lane.b32.xlu0 %v319, 96
        %v325 = vpop.permute.xlu0 %324
        %v328 = vadd.f32 %v268, %v323
        %v329 = vadd.f32 %v269, %v325
        %330 = vrot.lane.b32.xlu0 %v237, 64
        %v331 = vpop.permute.xlu0 %330
        %332 = vrot.lane.b32.xlu0 %v238, 64
        %v333 = vpop.permute.xlu0 %332
        %v336 = vsel %vm239, %v331, 0.0
        %337 = vadd.xlane.f32.xlu0 %v336
        %v338 = vpop.xlane.xlu0 %337
        %v339 = vsel %vm239, %v333, 0.0
        %340 = vadd.xlane.f32.xlu0 %v339
        %v341 = vpop.xlane.xlu0 %340
        %v342 = vadd.f32 %v338, 1e-12
        %v343 = vadd.f32 %v341, 1e-12
        %v344 = vrsqrt.pop %v342
        %v345 = vrsqrt.pop %v343
        %v346 = vmul.f32 %v233, %v344
        %v347 = vmul.f32 %v234, %v345
        %350 = vrot.lane.b32.xlu0 %v346, 64
        %v351 = vpop.permute.xlu0 %350
        %352 = vrot.lane.b32.xlu0 %v347, 64
        %v353 = vpop.permute.xlu0 %352
        %v356 = vadd.f32 %v298, %v351
        %v357 = vadd.f32 %v299, %v353
        %358 = vrot.lane.b32.xlu0 %v254, 64
        %v359 = vpop.permute.xlu0 %358
        %360 = vrot.lane.b32.xlu0 %v255, 64
        %v361 = vpop.permute.xlu0 %360
        %v364 = vsel %vm239, %v359, 0.0
        %365 = vadd.xlane.f32.xlu0 %v364
        %v366 = vpop.xlane.xlu0 %365
        %v367 = vsel %vm239, %v361, 0.0
        %368 = vadd.xlane.f32.xlu0 %v367
        %v369 = vpop.xlane.xlu0 %368
        %v370 = vadd.f32 %v366, 1e-12
        %v371 = vadd.f32 %v369, 1e-12
        %v372 = vrsqrt.pop %v370
        %v373 = vrsqrt.pop %v371
        %v374 = vmul.f32 %v235, %v372
        %v375 = vmul.f32 %v236, %v373
        %378 = vrot.lane.b32.xlu0 %v374, 64
        %v379 = vpop.permute.xlu0 %378
        %380 = vrot.lane.b32.xlu0 %v375, 64
        %v381 = vpop.permute.xlu0 %380
        %v384 = vadd.f32 %v328, %v379
        %v385 = vadd.f32 %v329, %v381
        %386 = vrot.lane.b32.xlu0 %v237, 32
        %v387 = vpop.permute.xlu0 %386
        %388 = vrot.lane.b32.xlu0 %v238, 32
        %v389 = vpop.permute.xlu0 %388
        %v392 = vsel %vm239, %v387, 0.0
        %393 = vadd.xlane.f32.xlu0 %v392
        %v394 = vpop.xlane.xlu0 %393
        %v395 = vsel %vm239, %v389, 0.0
        %396 = vadd.xlane.f32.xlu0 %v395
        %v397 = vpop.xlane.xlu0 %396
        %v398 = vadd.f32 %v394, 1e-12
        %v399 = vadd.f32 %v397, 1e-12
        %v400 = vrsqrt.pop %v398
        %v401 = vrsqrt.pop %v399
        %v402 = vmul.f32 %v233, %v400
        %v403 = vmul.f32 %v234, %v401
        %406 = vrot.lane.b32.xlu0 %v402, 32
        %v407 = vpop.permute.xlu0 %406
        %408 = vrot.lane.b32.xlu0 %v403, 32
        %v409 = vpop.permute.xlu0 %408
        %v412 = vadd.f32 %v356, %v407
        %v413 = vadd.f32 %v357, %v409
        %414 = vrot.lane.b32.xlu0 %v254, 32
        %v415 = vpop.permute.xlu0 %414
        %416 = vrot.lane.b32.xlu0 %v255, 32
        %v417 = vpop.permute.xlu0 %416
        %v420 = vsel %vm239, %v415, 0.0
        %421 = vadd.xlane.f32.xlu0 %v420
        %v422 = vpop.xlane.xlu0 %421
        %v423 = vsel %vm239, %v417, 0.0
        %424 = vadd.xlane.f32.xlu0 %v423
        %v425 = vpop.xlane.xlu0 %424
        %v426 = vadd.f32 %v422, 1e-12
        %v427 = vadd.f32 %v425, 1e-12
        %v428 = vrsqrt.pop %v426
        %v429 = vrsqrt.pop %v427
        %v430 = vmul.f32 %v235, %v428
        %v431 = vmul.f32 %v236, %v429
        %434 = vrot.lane.b32.xlu0 %v430, 32
        %v435 = vpop.permute.xlu0 %434
        %436 = vrot.lane.b32.xlu0 %v431, 32
        %v437 = vpop.permute.xlu0 %436
        %v440 = vadd.f32 %v384, %v435
        %v441 = vadd.f32 %v385, %v437
        %v442 = vld [vmem:[%s180 + $0x8] sm:$0xff]
        %v443 = vld [vmem:[%s180 + $0x18] sm:$0xff]
        %v444 = vld [vmem:[%s189 + $0x8] sm:$0xff]
        %v445 = vld [vmem:[%s189 + $0x18] sm:$0xff]
        %v446 = vmul.f32 %v442, %v442
        %v447 = vmul.f32 %v443, %v443
        %v448 = vsel %vm239, %v446, 0.0
        %449 = vadd.xlane.f32.xlu0 %v448
        %v450 = vpop.xlane.xlu0 %449
        %v451 = vsel %vm239, %v447, 0.0
        %452 = vadd.xlane.f32.xlu0 %v451
        %v453 = vpop.xlane.xlu0 %452
        %v454 = vadd.f32 %v450, 1e-12
        %v455 = vadd.f32 %v453, 1e-12
        %v456 = vrsqrt.pop %v454
        %v457 = vrsqrt.pop %v455
        %v458 = vmul.f32 %v442, %v456
        %v459 = vmul.f32 %v443, %v457
        %v460 = vadd.f32 %v412, %v458
        %v461 = vadd.f32 %v413, %v459
        %v462 = vmul.f32 %v444, %v444
        %v463 = vmul.f32 %v445, %v445
        %v464 = vsel %vm239, %v462, 0.0
        %465 = vadd.xlane.f32.xlu0 %v464
        %v466 = vpop.xlane.xlu0 %465
        %v467 = vsel %vm239, %v463, 0.0
        %468 = vadd.xlane.f32.xlu0 %v467
        %v469 = vpop.xlane.xlu0 %468
        %v470 = vadd.f32 %v466, 1e-12
        %v471 = vadd.f32 %v469, 1e-12
        %v472 = vrsqrt.pop %v470
        %v473 = vrsqrt.pop %v471
        %v474 = vmul.f32 %v444, %v472
        %v475 = vmul.f32 %v445, %v473
        %v476 = vadd.f32 %v440, %v474
        %v477 = vadd.f32 %v441, %v475
        %480 = vrot.lane.b32.xlu0 %v446, 96
        %v481 = vpop.permute.xlu0 %480
        %482 = vrot.lane.b32.xlu0 %v447, 96
        %v483 = vpop.permute.xlu0 %482
        %v486 = vsel %vm239, %v481, 0.0
        %487 = vadd.xlane.f32.xlu0 %v486
        %v488 = vpop.xlane.xlu0 %487
        %v489 = vsel %vm239, %v483, 0.0
        %490 = vadd.xlane.f32.xlu0 %v489
        %v491 = vpop.xlane.xlu0 %490
        %v492 = vadd.f32 %v488, 1e-12
        %v493 = vadd.f32 %v491, 1e-12
        %v494 = vrsqrt.pop %v492
        %v495 = vrsqrt.pop %v493
        %v496 = vmul.f32 %v442, %v494
        %v497 = vmul.f32 %v443, %v495
        %500 = vrot.lane.b32.xlu0 %v496, 96
        %v501 = vpop.permute.xlu0 %500
        %502 = vrot.lane.b32.xlu0 %v497, 96
        %v503 = vpop.permute.xlu0 %502
        %v506 = vadd.f32 %v460, %v501
        %v507 = vadd.f32 %v461, %v503
        %510 = vrot.lane.b32.xlu0 %v462, 96
        %v511 = vpop.permute.xlu0 %510
        %512 = vrot.lane.b32.xlu0 %v463, 96
        %v513 = vpop.permute.xlu0 %512
        %v516 = vsel %vm239, %v511, 0.0
        %517 = vadd.xlane.f32.xlu0 %v516
        %v518 = vpop.xlane.xlu0 %517
        %v519 = vsel %vm239, %v513, 0.0
        %520 = vadd.xlane.f32.xlu0 %v519
        %v521 = vpop.xlane.xlu0 %520
        %v522 = vadd.f32 %v518, 1e-12
        %v523 = vadd.f32 %v521, 1e-12
        %v524 = vrsqrt.pop %v522
        %v525 = vrsqrt.pop %v523
        %v526 = vmul.f32 %v444, %v524
        %v527 = vmul.f32 %v445, %v525
        %530 = vrot.lane.b32.xlu0 %v526, 96
        %v531 = vpop.permute.xlu0 %530
        %532 = vrot.lane.b32.xlu0 %v527, 96
        %v533 = vpop.permute.xlu0 %532
        %v536 = vadd.f32 %v476, %v531
        %v537 = vadd.f32 %v477, %v533
        %538 = vrot.lane.b32.xlu0 %v446, 64
        %v539 = vpop.permute.xlu0 %538
        %540 = vrot.lane.b32.xlu0 %v447, 64
        %v541 = vpop.permute.xlu0 %540
        %v544 = vsel %vm239, %v539, 0.0
        %545 = vadd.xlane.f32.xlu0 %v544
        %v546 = vpop.xlane.xlu0 %545
        %v547 = vsel %vm239, %v541, 0.0
        %548 = vadd.xlane.f32.xlu0 %v547
        %v549 = vpop.xlane.xlu0 %548
        %v550 = vadd.f32 %v546, 1e-12
        %v551 = vadd.f32 %v549, 1e-12
        %v552 = vrsqrt.pop %v550
        %v553 = vrsqrt.pop %v551
        %v554 = vmul.f32 %v442, %v552
        %v555 = vmul.f32 %v443, %v553
        %558 = vrot.lane.b32.xlu0 %v554, 64
        %v559 = vpop.permute.xlu0 %558
        %560 = vrot.lane.b32.xlu0 %v555, 64
        %v561 = vpop.permute.xlu0 %560
        %v564 = vadd.f32 %v506, %v559
        %v565 = vadd.f32 %v507, %v561
        %566 = vrot.lane.b32.xlu0 %v462, 64
        %v567 = vpop.permute.xlu0 %566
        %568 = vrot.lane.b32.xlu0 %v463, 64
        %v569 = vpop.permute.xlu0 %568
        %v572 = vsel %vm239, %v567, 0.0
        %573 = vadd.xlane.f32.xlu0 %v572
        %v574 = vpop.xlane.xlu0 %573
        %v575 = vsel %vm239, %v569, 0.0
        %576 = vadd.xlane.f32.xlu0 %v575
        %v577 = vpop.xlane.xlu0 %576
        %v578 = vadd.f32 %v574, 1e-12
        %v579 = vadd.f32 %v577, 1e-12
        %v580 = vrsqrt.pop %v578
        %v581 = vrsqrt.pop %v579
        %v582 = vmul.f32 %v444, %v580
        %v583 = vmul.f32 %v445, %v581
        %586 = vrot.lane.b32.xlu0 %v582, 64
        %v587 = vpop.permute.xlu0 %586
        %588 = vrot.lane.b32.xlu0 %v583, 64
        %v589 = vpop.permute.xlu0 %588
        %v592 = vadd.f32 %v536, %v587
        %v593 = vadd.f32 %v537, %v589
        %594 = vrot.lane.b32.xlu0 %v446, 32
        %v595 = vpop.permute.xlu0 %594
        %596 = vrot.lane.b32.xlu0 %v447, 32
        %v597 = vpop.permute.xlu0 %596
        %v600 = vsel %vm239, %v595, 0.0
        %601 = vadd.xlane.f32.xlu0 %v600
        %v602 = vpop.xlane.xlu0 %601
        %v603 = vsel %vm239, %v597, 0.0
        %604 = vadd.xlane.f32.xlu0 %v603
        %v605 = vpop.xlane.xlu0 %604
        %v606 = vadd.f32 %v602, 1e-12
        %v607 = vadd.f32 %v605, 1e-12
        %v608 = vrsqrt.pop %v606
        %v609 = vrsqrt.pop %v607
        %v610 = vmul.f32 %v442, %v608
        %v611 = vmul.f32 %v443, %v609
        %614 = vrot.lane.b32.xlu0 %v610, 32
        %v615 = vpop.permute.xlu0 %614
        %616 = vrot.lane.b32.xlu0 %v611, 32
        %v617 = vpop.permute.xlu0 %616
        %v620 = vadd.f32 %v564, %v615
        %v621 = vadd.f32 %v565, %v617
        %622 = vrot.lane.b32.xlu0 %v462, 32
        %v623 = vpop.permute.xlu0 %622
        %624 = vrot.lane.b32.xlu0 %v463, 32
        %v625 = vpop.permute.xlu0 %624
        %v628 = vsel %vm239, %v623, 0.0
        %629 = vadd.xlane.f32.xlu0 %v628
        %v630 = vpop.xlane.xlu0 %629
        %v631 = vsel %vm239, %v625, 0.0
        %632 = vadd.xlane.f32.xlu0 %v631
        %v633 = vpop.xlane.xlu0 %632
        %v634 = vadd.f32 %v630, 1e-12
        %v635 = vadd.f32 %v633, 1e-12
        %v636 = vrsqrt.pop %v634
        %v637 = vrsqrt.pop %v635
        %v638 = vmul.f32 %v444, %v636
        %v639 = vmul.f32 %v445, %v637
        %642 = vrot.lane.b32.xlu0 %v638, 32
        %v643 = vpop.permute.xlu0 %642
        %644 = vrot.lane.b32.xlu0 %v639, 32
        %v645 = vpop.permute.xlu0 %644
        %v648 = vadd.f32 %v592, %v643
        %v649 = vadd.f32 %v593, %v645
        %v650 = vmul.f32 %v620, %v648
        %v651 = vmul.f32 %v621, %v649
        %v652 = vsel %vm239, %v650, 0.0
        %653 = vadd.xlane.f32.xlu0 %v652
        %v654 = vpop.xlane.xlu0 %653
        %v655 = vsel %vm239, %v651, 0.0
        %656 = vadd.xlane.f32.xlu0 %v655
        %v657 = vpop.xlane.xlu0 %656
        %v658 = vmul.f32 %v654, 0.015625
        %v659 = vmul.f32 %v657, 0.015625
        %v660 = vlaneseq
        %v661 = vshrl.u32 %v660, 7
        %v662 = vadd.s32 %v661, 8
        %s663 = smul.u32 %s19, 16
        %v664 = vstv %s663
        %v665 = vadd.s32 %v664, %v661
        %v666 = vadd.s32 %v664, %v662
        %vm667 = vcmp.lt.s32.totalorder %v665, 50
        %vm668 = vcmp.lt.s32.totalorder %v666, 50
        %v669 = vsel %vm667, %v658, 0.0
        %v670 = vsel %vm668, %v659, 0.0
        %vm671 = vcmask 7168
        %672 = vst.msk [vmem:[%s231] sm:$0xff] %vm671, %v669
        %673 = vst.msk [vmem:[%s231 + $0x8] sm:$0xff] %vm671, %v670
        %s674 = smul.u32 2, %s19
        %p675 = scmp.lt.s32.totalorder %s674, 7
        %s676 = scalar_select %p675, %s674, 7
        %s677 = smul.addr %s676, 8
        %s678 = scalar_lea.vmem %s2, %s677
        // Predicated region
        $region37: #{tpu_custom_call.1} parent=27 // pred_check
          %p679 = pneg %p89
        $region38: #{tpu_custom_call.1} parent=27 // pred_check_branch
          %681 = sbr.rel (%p679) target = $region40
        $region39: #{tpu_custom_call.1} parent=27 // pred_region
          %s682 = smul.u32 2, %s19
        $region40: #{tpu_custom_call.1} parent=27 // pred_fallthru
          _
      $region28: #{tpu_custom_call.1} parent=5 // pred_fallthru
        _
      %p683 = scmp.le.s32.totalorder 2, %s14
      // Predicated region
      $region41: #{tpu_custom_call.1} parent=5 // pred_check
        %p684 = pneg %p683
      $region42: #{tpu_custom_call.1} parent=5 // pred_check_branch
        %686 = sbr.rel (%p684) target = $region44
      $region43: #{tpu_custom_call.1} parent=5 // pred_region
        %s687 = ssub.s32 %s14, 2
        // Predicated region
        $region45: #{tpu_custom_call.1} parent=43 // pred_check
          %p688 = pneg %p95
        $region46: #{tpu_custom_call.1} parent=43 // pred_check_branch
          %690 = sbr.rel (%p688) target = $region48
        $region47: #{tpu_custom_call.1} parent=43 // pred_region
          %s691 = smul.u32 2, %s20
          %p692 = scmp.lt.s32.totalorder %s691, 7
          %s693 = scalar_select %p692, %s691, 7
          %s694 = smul.addr %s693, 8
          %s695 = scalar_lea.vmem %s2, %s694
        $region48: #{tpu_custom_call.1} parent=43 // pred_fallthru
          _
      $region44: #{tpu_custom_call.1} parent=5 // pred_fallthru
        _
    $region6: #{tpu_custom_call.1} parent=1 // loop_footer
      %s18 = sadd.s32 1, %s14
    $region7: #{tpu_custom_call.1} parent=1 // loop_footer_branch
      %13 = sbr.rel target = $region3
    $region8: #{tpu_custom_call.1} parent=1 // loop_exit
      _
    %696 = vsyncpa [#allocation3], 1
    %s697 = scalar_lea.sflag [#allocation3], 1
    %698 = vsyncpa %s697, 1
    %699 = vsyncpa [#allocation5], 1
    %s700 = scalar_lea.sflag [#allocation5], 1
    %701 = vsyncpa %s700, 1

</llo_original>
